<compile_context>
chip_gen: v5e
topology: v5e:2x2
jax: 0.10.0
libtpu: 0.0.40
codegen_flags: <defaults>
</compile_context>

<pallas_src>
import functools

import jax
import jax.numpy as jnp
from jax.experimental import pallas as pl
from jax.experimental.pallas import tpu as pltpu

IN_F, HID_F, OUT_F = 5, 4, 3     # nn.Linear(5, 4) -> nn.Linear(4, 3)
PAD_F = 8                        # feature axes padded to one sublane tile


def networkb_kernel(x_ref, w1_ref, b1_ref, w2_ref, b2_ref, tgt_ref,
                    h_ref, logits_ref, lsum_ref, lcnt_ref):
    """One batch tile.  Everything is (features, batch_tile): batch on lanes."""
    hp = jax.lax.Precision.HIGHEST   # f32 parity with a PyTorch f32 GEMM

    # --- fc1 / fc2 on the MXU (N = batch tile is the large dim) ---
    x = x_ref[...]                                               # (8, TB)
    h8 = jnp.dot(w1_ref[...], x, precision=hp,
                 preferred_element_type=jnp.float32) + b1_ref[...]       # (8, TB)
    logits8 = jnp.dot(w2_ref[...], h8, precision=hp,
                      preferred_element_type=jnp.float32) + b2_ref[...]  # (8, TB)
    # Zero-padded weight/bias rows guarantee h8[4:] == 0 and logits8[3:] == 0;
    # only the true rows are stored / used below.
    h_ref[...] = h8[:HID_F, :]                                   # (4, TB)
    logits = logits8[:OUT_F, :]                                  # (3, TB)
    logits_ref[...] = logits

    # --- cross_entropy over axis 0 (classes), ignore_index=-1 ---
    m = jnp.max(logits, axis=0, keepdims=True)                   # (1, TB)
    lse = m + jnp.log(jnp.sum(jnp.exp(logits - m), axis=0, keepdims=True))
    cls = jax.lax.broadcasted_iota(jnp.int32, logits.shape, 0)   # (3, TB)
    tgt = tgt_ref[...]                                           # (1, TB) int32
    # TODO(synk): targets outside [0, OUT_F) that are not -1 silently contribute
    # `lse` (picked == 0); PyTorch raises a device-side error for them instead.
    picked = jnp.sum(jnp.where(cls == tgt, logits, 0.0), axis=0, keepdims=True)
    valid = (tgt != -1).astype(jnp.float32)                      # ignore_index
    nll = (lse - picked) * valid                                 # (1, TB)

    # Per-tile partial (sum, count); reduced in the wrapper.  Keeps the grid
    # axis "parallel" (v7x megacore) instead of a serial scalar accumulator.
    lsum_ref[...] = jnp.sum(nll, axis=1, keepdims=True)          # (1, 1)
    lcnt_ref[...] = jnp.sum(valid, axis=1, keepdims=True)        # (1, 1)


def prepare_params(fc1_w, fc1_b, fc2_w, fc2_b):
    """Done ONCE at init (outside the hot path).  Weights stay in PyTorch
    (out, in) orientation because the kernel computes y = W @ x_t."""
    w1p = jnp.zeros((PAD_F, PAD_F), jnp.float32).at[:HID_F, :IN_F].set(
        jnp.asarray(fc1_w, jnp.float32))
    b1p = jnp.zeros((PAD_F, 1), jnp.float32).at[:HID_F, 0].set(
        jnp.asarray(fc1_b, jnp.float32))
    w2p = jnp.zeros((PAD_F, PAD_F), jnp.float32).at[:OUT_F, :HID_F].set(
        jnp.asarray(fc2_w, jnp.float32))
    b2p = jnp.zeros((PAD_F, 1), jnp.float32).at[:OUT_F, 0].set(
        jnp.asarray(fc2_b, jnp.float32))
    return w1p, b1p, w2p, b2p


@functools.partial(jax.jit, static_argnames=("block_b",))
def networkb_forward(x, w1p, b1p, w2p, b2p, targets=None, *, block_b=2048):
    """Fast path.  x: (B, 5) f32, targets: (B,) int (or None).
    Returns (loss, logits_t, h_t) in the kernel-native (classes/features,
    padded_batch) layout: logits_t (3, Bp), h_t (4, Bp) with
    Bp = ceil(B / tile) * tile.  Columns [B:Bp] are zero-padded batch rows
    (their targets are forced to -1, so they never touch the loss)."""
    assert block_b % 128 == 0
    B = x.shape[0]
    tb = min(block_b, pl.cdiv(B, 128) * 128)   # lanes (batch rows) per tile
    bp = pl.cdiv(B, tb) * tb                   # padded batch
    grid = (bp // tb,)

    # Single fused pad+transpose into the lane-major layout the kernel wants.
    x_t = jnp.zeros((PAD_F, bp), jnp.float32).at[:IN_F, :B].set(
        x.astype(jnp.float32).T)
    if targets is None:
        tgt_t = jnp.full((1, bp), -1, dtype=jnp.int32)
    else:
        tgt_t = jnp.full((1, bp), -1, dtype=jnp.int32).at[0, :B].set(
            targets.reshape(-1).astype(jnp.int32))

    h_t, logits_t, lsum, lcnt = pl.pallas_call(
        networkb_kernel,
        grid=grid,
        in_specs=[
            pl.BlockSpec((PAD_F, tb), lambda i: (0, i)),       # x_t
            pl.BlockSpec((PAD_F, PAD_F), lambda i: (0, 0)),    # w1 (resident)
            pl.BlockSpec((PAD_F, 1), lambda i: (0, 0)),        # b1
            pl.BlockSpec((PAD_F, PAD_F), lambda i: (0, 0)),    # w2
            pl.BlockSpec((PAD_F, 1), lambda i: (0, 0)),        # b2
            pl.BlockSpec((1, tb), lambda i: (0, i)),           # targets
        ],
        out_specs=(
            pl.BlockSpec((HID_F, tb), lambda i: (0, i)),       # h, true width
            pl.BlockSpec((OUT_F, tb), lambda i: (0, i)),       # logits, true width
            pl.BlockSpec((1, 1), lambda i: (i, 0)),            # per-tile loss sum
            pl.BlockSpec((1, 1), lambda i: (i, 0)),            # per-tile count
        ),
        out_shape=(
            jax.ShapeDtypeStruct((HID_F, bp), jnp.float32),
            jax.ShapeDtypeStruct((OUT_F, bp), jnp.float32),
            jax.ShapeDtypeStruct((grid[0], 1), jnp.float32),
            jax.ShapeDtypeStruct((grid[0], 1), jnp.float32),
        ),
        compiler_params=pltpu.CompilerParams(
            dimension_semantics=("parallel",)),
    )(x_t, w1p, b1p, w2p, b2p, tgt_t)

    if targets is None:
        loss = None
    else:
        # Straight sum/count: all targets ignored -> 0/0 = NaN, as in PyTorch.
        loss = jnp.sum(lsum) / jnp.sum(lcnt)
    return loss, logits_t, h_t


@functools.partial(jax.jit, static_argnames=("block_b",))
def networkb_forward_torch_layout(x, w1p, b1p, w2p, b2p, targets=None, *,
                                  block_b=2048):
    """Convenience wrapper returning module-shaped outputs:
    (loss, logits (B,3), hidden_states (B,4)).  The back-transpose is an extra
    XLA pass over the outputs; perf-sensitive consumers should call
    networkb_forward and keep the (features, batch) layout."""
    B = x.shape[0]
    loss, logits_t, h_t = networkb_forward(x, w1p, b1p, w2p, b2p, targets,
                                           block_b=block_b)
    return loss, logits_t[:, :B].T, h_t[:, :B].T


def _reference(x, fc1_w, fc1_b, fc2_w, fc2_b, targets):
    hp = jax.lax.Precision.HIGHEST
    h = jnp.dot(x, fc1_w.T, precision=hp) + fc1_b
    logits = jnp.dot(h, fc2_w.T, precision=hp) + fc2_b
    lse = jax.nn.logsumexp(logits, axis=-1)
    picked = jnp.take_along_axis(
        logits, jnp.clip(targets, 0, OUT_F - 1)[:, None], axis=-1)[:, 0]
    valid = (targets != -1).astype(jnp.float32)
    loss = jnp.sum((lse - picked) * valid) / jnp.sum(valid)
    return loss, logits, h


if __name__ == "__main__":
    key = jax.random.PRNGKey(0)
    kx, kt, k1, k2, k3, k4 = jax.random.split(key, 6)

    # ---- small demo batch ----
    B = 8
    x = jax.random.normal(kx, (B, IN_F), dtype=jnp.float32)
    targets = jax.random.randint(kt, (B,), 0, OUT_F, dtype=jnp.int32)
    targets = targets.at[0].set(-1)   # exercise ignore_index=-1

    # PyTorch-style Linear init: U(-1/sqrt(fan_in), 1/sqrt(fan_in))
    bnd1 = 1.0 / (IN_F ** 0.5)
    w1 = jax.random.uniform(k1, (HID_F, IN_F), jnp.float32, -bnd1, bnd1)
    b1 = jax.random.uniform(k2, (HID_F,), jnp.float32, -bnd1, bnd1)
    bnd2 = 1.0 / (HID_F ** 0.5)
    w2 = jax.random.uniform(k3, (OUT_F, HID_F), jnp.float32, -bnd2, bnd2)
    b2 = jax.random.uniform(k4, (OUT_F,), jnp.float32, -bnd2, bnd2)

    params = prepare_params(w1, b1, w2, b2)   # padded once, outside hot path

    loss, logits, hidden = networkb_forward_torch_layout(x, *params, targets)
    jax.block_until_ready((loss, logits, hidden))

    ref_loss, ref_logits, ref_h = _reference(x, w1, b1, w2, b2, targets)
    assert logits.shape == (B, OUT_F) and hidden.shape == (B, HID_F)
    assert jnp.allclose(logits, ref_logits, atol=1e-5)
    assert jnp.allclose(hidden, ref_h, atol=1e-5)
    assert jnp.allclose(loss, ref_loss, atol=1e-5)

    # ---- multi-tile / batch-padding path (grid > 1, B not a block multiple) ----
    B2 = 260
    kx2, kt2 = jax.random.split(jax.random.PRNGKey(1))
    x2 = jax.random.normal(kx2, (B2, IN_F), dtype=jnp.float32)
    t2 = jax.random.randint(kt2, (B2,), -1, OUT_F, dtype=jnp.int32)  # some ignored
    loss2, logits2_t, h2_t = networkb_forward(x2, *params, t2, block_b=128)
    jax.block_until_ready((loss2, logits2_t, h2_t))

    ref_loss2, ref_logits2, ref_h2 = _reference(x2, w1, b1, w2, b2, t2)
    assert jnp.allclose(logits2_t[:, :B2].T, ref_logits2, atol=1e-5)
    assert jnp.allclose(h2_t[:, :B2].T, ref_h2, atol=1e-5)
    assert jnp.allclose(loss2, ref_loss2, atol=1e-5)

    print("KERNEL_OK")
</pallas_src>

<mosaic_0001>
module attributes {stable_mosaic.version = 11 : i64} {
  func.func @networkb_kernel(%arg0: i32, %arg1: memref<8x128xf32, #tpu.memory_space<vmem>>, %arg2: memref<8x8xf32, #tpu.memory_space<vmem>>, %arg3: memref<8x1xf32, #tpu.memory_space<vmem>>, %arg4: memref<8x8xf32, #tpu.memory_space<vmem>>, %arg5: memref<8x1xf32, #tpu.memory_space<vmem>>, %arg6: memref<1x128xi32, #tpu.memory_space<vmem>>, %arg7: memref<4x128xf32, #tpu.memory_space<vmem>>, %arg8: memref<3x128xf32, #tpu.memory_space<vmem>>, %arg9: memref<1x1xf32, #tpu.memory_space<vmem>>, %arg10: memref<1x1xf32, #tpu.memory_space<vmem>>) attributes {dimension_semantics = [#tpu.dimension_semantics<parallel>], iteration_bounds = array<i64: 1>, scalar_prefetch = 0 : i64, scratch_operands = 0 : i64, tpu.core_type = #tpu.core_type<tc>, window_params = [{transform_indices = @transform_0, window_bounds = array<i64: 8, 128>}, {pipeline_mode = #tpu.pipeline_mode<synchronous>, transform_indices = @transform_1, window_bounds = array<i64: 8, 8>}, {pipeline_mode = #tpu.pipeline_mode<synchronous>, transform_indices = @transform_2, window_bounds = array<i64: 8, 1>}, {pipeline_mode = #tpu.pipeline_mode<synchronous>, transform_indices = @transform_3, window_bounds = array<i64: 8, 8>}, {pipeline_mode = #tpu.pipeline_mode<synchronous>, transform_indices = @transform_4, window_bounds = array<i64: 8, 1>}, {transform_indices = @transform_5, window_bounds = array<i64: 1, 128>}, {transform_indices = @transform_6, window_bounds = array<i64: 4, 128>}, {transform_indices = @transform_7, window_bounds = array<i64: 3, 128>}, {transform_indices = @transform_8, window_bounds = array<i64: 1, 1>}, {transform_indices = @transform_9, window_bounds = array<i64: 1, 1>}]} {
    %c0 = arith.constant 0 : index
    %c0_0 = arith.constant 0 : index
    %0 = vector.load %arg1[%c0, %c0_0] : memref<8x128xf32, #tpu.memory_space<vmem>>, vector<8x128xf32>
    %c0_1 = arith.constant 0 : index
    %c0_2 = arith.constant 0 : index
    %1 = vector.load %arg2[%c0_1, %c0_2] : memref<8x8xf32, #tpu.memory_space<vmem>>, vector<8x8xf32>
    %cst = arith.constant dense<0.000000e+00> : vector<8x128xf32>
    %2 = tpu.matmul %1, %0, %cst {dimension_numbers = #tpu.dot_dimension_numbers<[1], [0], [0], [1], [0, 0, 1, 1], [], []>, precision = #tpu.contract_precision<fp32>} : vector<8x8xf32>, vector<8x128xf32>, vector<8x128xf32> -> vector<8x128xf32>
    %c0_3 = arith.constant 0 : index
    %c0_4 = arith.constant 0 : index
    %3 = vector.load %arg3[%c0_3, %c0_4] : memref<8x1xf32, #tpu.memory_space<vmem>>, vector<8x1xf32>
    %4 = vector.broadcast %3 : vector<8x1xf32> to vector<8x128xf32>
    %5 = arith.addf %2, %4 : vector<8x128xf32>
    %c0_5 = arith.constant 0 : index
    %c0_6 = arith.constant 0 : index
    %6 = vector.load %arg4[%c0_5, %c0_6] : memref<8x8xf32, #tpu.memory_space<vmem>>, vector<8x8xf32>
    %cst_7 = arith.constant dense<0.000000e+00> : vector<8x128xf32>
    %7 = tpu.matmul %6, %5, %cst_7 {dimension_numbers = #tpu.dot_dimension_numbers<[1], [0], [0], [1], [0, 0, 1, 1], [], []>, precision = #tpu.contract_precision<fp32>} : vector<8x8xf32>, vector<8x128xf32>, vector<8x128xf32> -> vector<8x128xf32>
    %c0_8 = arith.constant 0 : index
    %c0_9 = arith.constant 0 : index
    %8 = vector.load %arg5[%c0_8, %c0_9] : memref<8x1xf32, #tpu.memory_space<vmem>>, vector<8x1xf32>
    %9 = vector.broadcast %8 : vector<8x1xf32> to vector<8x128xf32>
    %10 = arith.addf %7, %9 : vector<8x128xf32>
    %11 = vector.extract_strided_slice %5 {offsets = [0, 0], sizes = [4, 128], strides = [1, 1]} : vector<8x128xf32> to vector<4x128xf32>
    %c0_10 = arith.constant 0 : index
    %c0_11 = arith.constant 0 : index
    %12 = vector.load %arg7[%c0_10, %c0_11] : memref<4x128xf32, #tpu.memory_space<vmem>>, vector<4x128xf32>
    tpu.vector_store %arg7[%c0_10, %c0_11], %11 {strides = array<i32>} : memref<4x128xf32, #tpu.memory_space<vmem>>, vector<4x128xf32>,
    %13 = vector.extract_strided_slice %10 {offsets = [0, 0], sizes = [3, 128], strides = [1, 1]} : vector<8x128xf32> to vector<3x128xf32>
    %c0_12 = arith.constant 0 : index
    %c0_13 = arith.constant 0 : index
    %14 = vector.load %arg8[%c0_12, %c0_13] : memref<3x128xf32, #tpu.memory_space<vmem>>, vector<3x128xf32>
    tpu.vector_store %arg8[%c0_12, %c0_13], %13 {strides = array<i32>} : memref<3x128xf32, #tpu.memory_space<vmem>>, vector<3x128xf32>,
    %cst_14 = arith.constant dense<0xFF800000> : vector<128xf32>
    %15 = vector.multi_reduction <maximumf>, %13, %cst_14 [0] : vector<3x128xf32> to vector<128xf32>
    %16 = vector.shape_cast %15 : vector<128xf32> to vector<1x128xf32>
    %17 = vector.broadcast %16 : vector<1x128xf32> to vector<3x128xf32>
    %18 = arith.subf %13, %17 : vector<3x128xf32>
    %19 = math.exp %18 : vector<3x128xf32>
    %cst_15 = arith.constant dense<0.000000e+00> : vector<128xf32>
    %20 = vector.multi_reduction <add>, %19, %cst_15 [0] : vector<3x128xf32> to vector<128xf32>
    %21 = vector.shape_cast %20 : vector<128xf32> to vector<1x128xf32>
    %22 = math.log %21 : vector<1x128xf32>
    %23 = arith.addf %16, %22 : vector<1x128xf32>
    %24 = tpu.iota {dimensions = array<i32: 0>} : vector<3x128xi32>
    %c0_16 = arith.constant 0 : index
    %c0_17 = arith.constant 0 : index
    %25 = vector.load %arg6[%c0_16, %c0_17] : memref<1x128xi32, #tpu.memory_space<vmem>>, vector<1x128xi32>
    %26 = vector.broadcast %25 : vector<1x128xi32> to vector<3x128xi32>
    %27 = arith.cmpi eq, %24, %26 : vector<3x128xi32>
    %cst_18 = arith.constant 0.000000e+00 : f32
    %28 = vector.broadcast %cst_18 : f32 to vector<3x128xf32>
    %29 = arith.select %27, %13, %28 : vector<3x128xi1>, vector<3x128xf32>
    %cst_19 = arith.constant dense<0.000000e+00> : vector<128xf32>
    %30 = vector.multi_reduction <add>, %29, %cst_19 [0] : vector<3x128xf32> to vector<128xf32>
    %31 = vector.shape_cast %30 : vector<128xf32> to vector<1x128xf32>
    %c-1_i32 = arith.constant -1 : i32
    %32 = vector.broadcast %c-1_i32 : i32 to vector<1x128xi32>
    %33 = arith.cmpi ne, %25, %32 : vector<1x128xi32>
    %34 = arith.extui %33 : vector<1x128xi1> to vector<1x128xi32>
    %35 = arith.sitofp %34 : vector<1x128xi32> to vector<1x128xf32>
    %36 = arith.subf %23, %31 : vector<1x128xf32>
    %37 = arith.mulf %36, %35 : vector<1x128xf32>
    %cst_20 = arith.constant dense<0.000000e+00> : vector<1xf32>
    %38 = vector.multi_reduction <add>, %37, %cst_20 [1] : vector<1x128xf32> to vector<1xf32>
    %39 = vector.shape_cast %38 : vector<1xf32> to vector<1x1xf32>
    %c0_21 = arith.constant 0 : index
    %c0_22 = arith.constant 0 : index
    %40 = vector.load %arg9[%c0_21, %c0_22] : memref<1x1xf32, #tpu.memory_space<vmem>>, vector<1x1xf32>
    tpu.vector_store %arg9[%c0_21, %c0_22], %39 {strides = array<i32>} : memref<1x1xf32, #tpu.memory_space<vmem>>, vector<1x1xf32>,
    %cst_23 = arith.constant dense<0.000000e+00> : vector<1xf32>
    %41 = vector.multi_reduction <add>, %35, %cst_23 [1] : vector<1x128xf32> to vector<1xf32>
    %42 = vector.shape_cast %41 : vector<1xf32> to vector<1x1xf32>
    %c0_24 = arith.constant 0 : index
    %c0_25 = arith.constant 0 : index
    %43 = vector.load %arg10[%c0_24, %c0_25] : memref<1x1xf32, #tpu.memory_space<vmem>>, vector<1x1xf32>
    tpu.vector_store %arg10[%c0_24, %c0_25], %42 {strides = array<i32>} : memref<1x1xf32, #tpu.memory_space<vmem>>, vector<1x1xf32>,
    return
  }
  func.func @transform_0(%arg0: i32) -> (i32, i32) {
    %c0_i32 = arith.constant 0 : i32
    %c0_i32_0 = arith.constant 0 : i32
    return %c0_i32, %arg0 : i32, i32
  }
  func.func @transform_1(%arg0: i32) -> (i32, i32) {
    %c0_i32 = arith.constant 0 : i32
    %c0_i32_0 = arith.constant 0 : i32
    %c0_i32_1 = arith.constant 0 : i32
    return %c0_i32, %c0_i32_0 : i32, i32
  }
  func.func @transform_2(%arg0: i32) -> (i32, i32) {
    %c0_i32 = arith.constant 0 : i32
    %c0_i32_0 = arith.constant 0 : i32
    %c0_i32_1 = arith.constant 0 : i32
    return %c0_i32, %c0_i32_0 : i32, i32
  }
  func.func @transform_3(%arg0: i32) -> (i32, i32) {
    %c0_i32 = arith.constant 0 : i32
    %c0_i32_0 = arith.constant 0 : i32
    %c0_i32_1 = arith.constant 0 : i32
    return %c0_i32, %c0_i32_0 : i32, i32
  }
  func.func @transform_4(%arg0: i32) -> (i32, i32) {
    %c0_i32 = arith.constant 0 : i32
    %c0_i32_0 = arith.constant 0 : i32
    %c0_i32_1 = arith.constant 0 : i32
    return %c0_i32, %c0_i32_0 : i32, i32
  }
  func.func @transform_5(%arg0: i32) -> (i32, i32) {
    %c0_i32 = arith.constant 0 : i32
    %c0_i32_0 = arith.constant 0 : i32
    return %c0_i32, %arg0 : i32, i32
  }
  func.func @transform_6(%arg0: i32) -> (i32, i32) {
    %c0_i32 = arith.constant 0 : i32
    %c0_i32_0 = arith.constant 0 : i32
    return %c0_i32, %arg0 : i32, i32
  }
  func.func @transform_7(%arg0: i32) -> (i32, i32) {
    %c0_i32 = arith.constant 0 : i32
    %c0_i32_0 = arith.constant 0 : i32
    return %c0_i32, %arg0 : i32, i32
  }
  func.func @transform_8(%arg0: i32) -> (i32, i32) {
    %c0_i32 = arith.constant 0 : i32
    %c0_i32_0 = arith.constant 0 : i32
    return %arg0, %c0_i32 : i32, i32
  }
  func.func @transform_9(%arg0: i32) -> (i32, i32) {
    %c0_i32 = arith.constant 0 : i32
    %c0_i32_0 = arith.constant 0 : i32
    return %arg0, %c0_i32 : i32, i32
  }
}

</mosaic_0001>

<llo_original>
// kernel: networkb_forward.1
$region0: #{networkb_forward.1}
  #allocation0 [shape = 'u32[]', space=smem, size = 0x4, offset = 0x4, fixed_abs, tag = 'smem constant byte address 0x4 - core index']
  #allocation1 [shape = 'u32[72,128]{1,0:T(1,128)}', space=vmem, size = 0x9000, scoped, tag = 'internal scratch']
  %s0 = inlined_call_operand.vmem [shape: f32[8,128], index: 0, kind: input, shape index: {}]
  %s1 = inlined_call_operand.vmem [shape: f32[8,8], index: 1, kind: input, shape index: {}]
  %s2 = inlined_call_operand.vmem [shape: f32[8,1], index: 2, kind: input, shape index: {}]
  %s3 = inlined_call_operand.vmem [shape: f32[8,8], index: 3, kind: input, shape index: {}]
  %s4 = inlined_call_operand.vmem [shape: f32[8,1], index: 4, kind: input, shape index: {}]
  %s5 = inlined_call_operand.vmem [shape: s32[1,128], index: 5, kind: input, shape index: {}]
  %s6 = inlined_call_operand.hbm [shape: f32[4,128], index: 6, kind: output, shape index: {0}]
  %s7 = inlined_call_operand.hbm [shape: f32[3,128], index: 7, kind: output, shape index: {1}]
  %s8 = inlined_call_operand.hbm [shape: f32[1,1], index: 8, kind: output, shape index: {2}]
  %s9 = inlined_call_operand.hbm [shape: f32[1,1], index: 9, kind: output, shape index: {3}]
  %10 = xla_tuple %s6, %s7, %s8, %s9
  %s11 = sld [smem:[#allocation0]]
  $region58: #{networkb_forward.1} parent=0
    _
  %s13 = ssub.s32 1, %s11
  %s14 = scalar_select 0, %s13, %s11
  $region1: #{networkb_forward.1} parent=0
    #allocation2 [shape = 'u8[2048]{0}', space=vmem, size = 0x800, scoped, tag = 'output window, operand 0, single buffered']
    #allocation3 [shape = 's32[1]{0}', space=sflag, size = 0x4, scoped, tag = 'scoped memory for networkb_forward.1']
    #allocation4 [shape = 'u8[2048]{0}', space=vmem, size = 0x800, scoped, tag = 'output window, operand 1, single buffered']
    #allocation5 [shape = 's32[1]{0}', space=sflag, size = 0x4, scoped, tag = 'scoped memory for networkb_forward.1']
    #allocation6 [shape = 'u8[512]{0}', space=vmem, size = 0x400, scoped, tag = 'output window, operand 2, single buffered']
    #allocation7 [shape = 'u8[512]{0}', space=vmem, size = 0x400, scoped, tag = 'output window, operand 3, single buffered']
    #allocation8 [shape = 's32[1]{0}', space=sflag, size = 0x4, scoped, tag = 'scoped memory for networkb_forward.1']
    %15 = vsyncpa [#allocation3], 0
    %16 = vsyncpa [#allocation5], 0
    %17 = vsyncpa [#allocation8], 0
    // Predicated region
    $region2: #{networkb_forward.1} parent=1 // pred_check
      _
    $region3: #{networkb_forward.1} parent=1 // pred_check_branch
      %19 = sbr.rel (0) target = $region5
    $region4: #{networkb_forward.1} parent=1 // pred_region
      _
    $region5: #{networkb_forward.1} parent=1 // pred_fallthru
      _
    // Predicated region
    $region6: #{networkb_forward.1} parent=1 // pred_check
      _
    $region7: #{networkb_forward.1} parent=1 // pred_check_branch
      %21 = sbr.rel (0) target = $region9
    $region8: #{networkb_forward.1} parent=1 // pred_region
      _
    $region9: #{networkb_forward.1} parent=1 // pred_fallthru
      _
    // Predicated region
    $region10: #{networkb_forward.1} parent=1 // pred_check
      _
    $region11: #{networkb_forward.1} parent=1 // pred_check_branch
      %23 = sbr.rel (0) target = $region13
    $region12: #{networkb_forward.1} parent=1 // pred_region
      _
    $region13: #{networkb_forward.1} parent=1 // pred_fallthru
      _
    // Predicated region
    $region14: #{networkb_forward.1} parent=1 // pred_check
      _
    $region15: #{networkb_forward.1} parent=1 // pred_check_branch
      %25 = sbr.rel (0) target = $region17
    $region16: #{networkb_forward.1} parent=1 // pred_region
      _
    $region17: #{networkb_forward.1} parent=1 // pred_fallthru
      _
    // Predicated region
    $region18: #{networkb_forward.1} parent=1 // pred_check
      _
    $region19: #{networkb_forward.1} parent=1 // pred_check_branch
      %27 = sbr.rel (0) target = $region21
    $region20: #{networkb_forward.1} parent=1 // pred_region
      _
    $region21: #{networkb_forward.1} parent=1 // pred_fallthru
      _
    // Predicated region
    $region22: #{networkb_forward.1} parent=1 // pred_check
      _
    $region23: #{networkb_forward.1} parent=1 // pred_check_branch
      %29 = sbr.rel (0) target = $region25
    $region24: #{networkb_forward.1} parent=1 // pred_region
      _
    $region25: #{networkb_forward.1} parent=1 // pred_fallthru
      _
    %v30 = vld [vmem:[%s0] sm:$0xff]
    %v31 = vld [vmem:[%s1] sm:$0xff]
    %v32 = vld [vmem:[%s2] sm:$0xff]
    %34 = vset.pattern.permute.xlu0 0
    %35 = vperm.xlu0 %34, %v32
    %v36 = vpop.permute.xlu0 %35
    %vm38 = vcmask 64512
    %v40 = vsel %vm38, %v31, 0
    %42 = vmatpush.msra.mxu0 0.0
    %43 = vmatpush.msra.mxu0 0.0
    %44 = vmatpush.msra.mxu0 0.0
    %45 = vmatpush.msra.mxu0 0.0
    %46 = vmatpush.msra.mxu0 0.0
    %47 = vmatpush.msra.mxu0 0.0
    %48 = vmatpush.msra.mxu0 0.0
    %49 = vmatpush.msra.mxu0 0.0
    %50 = vmatpush.msra.mxu0 0.0
    %51 = vmatpush.msra.mxu0 0.0
    %52 = vmatpush.msra.mxu0 0.0
    %53 = vmatpush.msra.mxu0 0.0
    %54 = vmatpush.msra.mxu0 0.0
    %55 = vmatpush.msra.mxu0 0.0
    %56 = vmatpush.msra.mxu0 0.0
    %v57 = vand.u32 %v30, 4294901760
    %58 = vmatpush.msra.mxu0 %v57
    %v59 = vand.u32 %v40, 4294901760
    %v60 = vsub.f32 %v40, %v59
    %v61 = vand.u32 %v60, 4294901760
    %v62 = vsub.f32 %v60, %v61
    %v63 = vand.u32 %v62, 4294901760
    %64 = vmatmul.f32.gmra.mxu0 %v63
    %v65 = vpop.f32.mrf.mxu0
    %v66 = vadd.f32 %v36, %v65
    %67 = vdwg.mxu0
    %68 = vmatpush.msra.mxu0 0.0
    %69 = vmatpush.msra.mxu0 0.0
    %70 = vmatpush.msra.mxu0 0.0
    %71 = vmatpush.msra.mxu0 0.0
    %72 = vmatpush.msra.mxu0 0.0
    %73 = vmatpush.msra.mxu0 0.0
    %74 = vmatpush.msra.mxu0 0.0
    %75 = vmatpush.msra.mxu0 0.0
    %76 = vmatpush.msra.mxu0 0.0
    %77 = vmatpush.msra.mxu0 0.0
    %78 = vmatpush.msra.mxu0 0.0
    %79 = vmatpush.msra.mxu0 0.0
    %80 = vmatpush.msra.mxu0 0.0
    %81 = vmatpush.msra.mxu0 0.0
    %82 = vmatpush.msra.mxu0 0.0
    %v83 = vand.u32 %v30, 4294901760
    %v84 = vsub.f32 %v30, %v83
    %v85 = vand.u32 %v84, 4294901760
    %v86 = vsub.f32 %v84, %v85
    %v87 = vand.u32 %v86, 4294901760
    %88 = vmatpush.msra.mxu0 %v87
    %v89 = vand.u32 %v40, 4294901760
    %90 = vmatmul.f32.gmra.mxu0 %v89
    %v91 = vpop.f32.mrf.mxu0
    %v92 = vadd.f32 %v66, %v91
    %93 = vdwg.mxu0
    %94 = vmatpush.msra.mxu0 0.0
    %95 = vmatpush.msra.mxu0 0.0
    %96 = vmatpush.msra.mxu0 0.0
    %97 = vmatpush.msra.mxu0 0.0
    %98 = vmatpush.msra.mxu0 0.0
    %99 = vmatpush.msra.mxu0 0.0
    %100 = vmatpush.msra.mxu0 0.0
    %101 = vmatpush.msra.mxu0 0.0
    %102 = vmatpush.msra.mxu0 0.0
    %103 = vmatpush.msra.mxu0 0.0
    %104 = vmatpush.msra.mxu0 0.0
    %105 = vmatpush.msra.mxu0 0.0
    %106 = vmatpush.msra.mxu0 0.0
    %107 = vmatpush.msra.mxu0 0.0
    %108 = vmatpush.msra.mxu0 0.0
    %v109 = vand.u32 %v30, 4294901760
    %v110 = vsub.f32 %v30, %v109
    %111 = vmatpush.msra.mxu0 %v110
    %v112 = vand.u32 %v40, 4294901760
    %v113 = vsub.f32 %v40, %v112
    %114 = vmatmul.f32.gmra.mxu0 %v113
    %v115 = vpop.f32.mrf.mxu0
    %v116 = vadd.f32 %v92, %v115
    %117 = vdwg.mxu0
    %118 = vmatpush.msra.mxu0 0.0
    %119 = vmatpush.msra.mxu0 0.0
    %120 = vmatpush.msra.mxu0 0.0
    %121 = vmatpush.msra.mxu0 0.0
    %122 = vmatpush.msra.mxu0 0.0
    %123 = vmatpush.msra.mxu0 0.0
    %124 = vmatpush.msra.mxu0 0.0
    %125 = vmatpush.msra.mxu0 0.0
    %126 = vmatpush.msra.mxu0 0.0
    %127 = vmatpush.msra.mxu0 0.0
    %128 = vmatpush.msra.mxu0 0.0
    %129 = vmatpush.msra.mxu0 0.0
    %130 = vmatpush.msra.mxu0 0.0
    %131 = vmatpush.msra.mxu0 0.0
    %132 = vmatpush.msra.mxu0 0.0
    %v133 = vand.u32 %v30, 4294901760
    %134 = vmatpush.msra.mxu0 %v133
    %v135 = vand.u32 %v40, 4294901760
    %v136 = vsub.f32 %v40, %v135
    %v137 = vand.u32 %v136, 4294901760
    %138 = vmatmul.f32.gmra.mxu0 %v137
    %v139 = vpop.f32.mrf.mxu0
    %v140 = vadd.f32 %v116, %v139
    %141 = vdwg.mxu0
    %142 = vmatpush.msra.mxu0 0.0
    %143 = vmatpush.msra.mxu0 0.0
    %144 = vmatpush.msra.mxu0 0.0
    %145 = vmatpush.msra.mxu0 0.0
    %146 = vmatpush.msra.mxu0 0.0
    %147 = vmatpush.msra.mxu0 0.0
    %148 = vmatpush.msra.mxu0 0.0
    %149 = vmatpush.msra.mxu0 0.0
    %150 = vmatpush.msra.mxu0 0.0
    %151 = vmatpush.msra.mxu0 0.0
    %152 = vmatpush.msra.mxu0 0.0
    %153 = vmatpush.msra.mxu0 0.0
    %154 = vmatpush.msra.mxu0 0.0
    %155 = vmatpush.msra.mxu0 0.0
    %156 = vmatpush.msra.mxu0 0.0
    %v157 = vand.u32 %v30, 4294901760
    %v158 = vsub.f32 %v30, %v157
    %v159 = vand.u32 %v158, 4294901760
    %160 = vmatpush.msra.mxu0 %v159
    %v161 = vand.u32 %v40, 4294901760
    %162 = vmatmul.f32.gmra.mxu0 %v161
    %v163 = vpop.f32.mrf.mxu0
    %v164 = vadd.f32 %v140, %v163
    %165 = vdwg.mxu0
    %166 = vmatpush.msra.mxu0 0.0
    %167 = vmatpush.msra.mxu0 0.0
    %168 = vmatpush.msra.mxu0 0.0
    %169 = vmatpush.msra.mxu0 0.0
    %170 = vmatpush.msra.mxu0 0.0
    %171 = vmatpush.msra.mxu0 0.0
    %172 = vmatpush.msra.mxu0 0.0
    %173 = vmatpush.msra.mxu0 0.0
    %174 = vmatpush.msra.mxu0 0.0
    %175 = vmatpush.msra.mxu0 0.0
    %176 = vmatpush.msra.mxu0 0.0
    %177 = vmatpush.msra.mxu0 0.0
    %178 = vmatpush.msra.mxu0 0.0
    %179 = vmatpush.msra.mxu0 0.0
    %180 = vmatpush.msra.mxu0 0.0
    %v181 = vand.u32 %v30, 4294901760
    %182 = vmatpush.msra.mxu0 %v181
    %v183 = vand.u32 %v40, 4294901760
    %184 = vmatmul.f32.gmra.mxu0 %v183
    %v185 = vpop.f32.mrf.mxu0
    %v186 = vadd.f32 %v164, %v185
    %187 = vdwg.mxu0
    %v188 = vld [vmem:[%s3] sm:$0xff]
    %v189 = vld [vmem:[%s4] sm:$0xff]
    %191 = vset.pattern.permute.xlu0 0
    %192 = vperm.xlu0 %191, %v189
    %v193 = vpop.permute.xlu0 %192
    %v196 = vsel %vm38, %v188, 0
    %198 = vmatpush.msra.mxu0 0.0
    %199 = vmatpush.msra.mxu0 0.0
    %200 = vmatpush.msra.mxu0 0.0
    %201 = vmatpush.msra.mxu0 0.0
    %202 = vmatpush.msra.mxu0 0.0
    %203 = vmatpush.msra.mxu0 0.0
    %204 = vmatpush.msra.mxu0 0.0
    %205 = vmatpush.msra.mxu0 0.0
    %206 = vmatpush.msra.mxu0 0.0
    %207 = vmatpush.msra.mxu0 0.0
    %208 = vmatpush.msra.mxu0 0.0
    %209 = vmatpush.msra.mxu0 0.0
    %210 = vmatpush.msra.mxu0 0.0
    %211 = vmatpush.msra.mxu0 0.0
    %212 = vmatpush.msra.mxu0 0.0
    %v213 = vand.u32 %v186, 4294901760
    %214 = vmatpush.msra.mxu0 %v213
    %v215 = vand.u32 %v196, 4294901760
    %v216 = vsub.f32 %v196, %v215
    %v217 = vand.u32 %v216, 4294901760
    %v218 = vsub.f32 %v216, %v217
    %v219 = vand.u32 %v218, 4294901760
    %220 = vmatmul.f32.gmra.mxu0 %v219
    %v221 = vpop.f32.mrf.mxu0
    %v222 = vadd.f32 %v193, %v221
    %223 = vdwg.mxu0
    %224 = vmatpush.msra.mxu0 0.0
    %225 = vmatpush.msra.mxu0 0.0
    %226 = vmatpush.msra.mxu0 0.0
    %227 = vmatpush.msra.mxu0 0.0
    %228 = vmatpush.msra.mxu0 0.0
    %229 = vmatpush.msra.mxu0 0.0
    %230 = vmatpush.msra.mxu0 0.0
    %231 = vmatpush.msra.mxu0 0.0
    %232 = vmatpush.msra.mxu0 0.0
    %233 = vmatpush.msra.mxu0 0.0
    %234 = vmatpush.msra.mxu0 0.0
    %235 = vmatpush.msra.mxu0 0.0
    %236 = vmatpush.msra.mxu0 0.0
    %237 = vmatpush.msra.mxu0 0.0
    %238 = vmatpush.msra.mxu0 0.0
    %v239 = vand.u32 %v186, 4294901760
    %v240 = vsub.f32 %v186, %v239
    %v241 = vand.u32 %v240, 4294901760
    %v242 = vsub.f32 %v240, %v241
    %v243 = vand.u32 %v242, 4294901760
    %244 = vmatpush.msra.mxu0 %v243
    %v245 = vand.u32 %v196, 4294901760
    %246 = vmatmul.f32.gmra.mxu0 %v245
    %v247 = vpop.f32.mrf.mxu0
    %v248 = vadd.f32 %v222, %v247
    %249 = vdwg.mxu0
    %250 = vmatpush.msra.mxu0 0.0
    %251 = vmatpush.msra.mxu0 0.0
    %252 = vmatpush.msra.mxu0 0.0
    %253 = vmatpush.msra.mxu0 0.0
    %254 = vmatpush.msra.mxu0 0.0
    %255 = vmatpush.msra.mxu0 0.0
    %256 = vmatpush.msra.mxu0 0.0
    %257 = vmatpush.msra.mxu0 0.0
    %258 = vmatpush.msra.mxu0 0.0
    %259 = vmatpush.msra.mxu0 0.0
    %260 = vmatpush.msra.mxu0 0.0
    %261 = vmatpush.msra.mxu0 0.0
    %262 = vmatpush.msra.mxu0 0.0
    %263 = vmatpush.msra.mxu0 0.0
    %264 = vmatpush.msra.mxu0 0.0
    %v265 = vand.u32 %v186, 4294901760
    %v266 = vsub.f32 %v186, %v265
    %267 = vmatpush.msra.mxu0 %v266
    %v268 = vand.u32 %v196, 4294901760
    %v269 = vsub.f32 %v196, %v268
    %270 = vmatmul.f32.gmra.mxu0 %v269
    %v271 = vpop.f32.mrf.mxu0
    %v272 = vadd.f32 %v248, %v271
    %273 = vdwg.mxu0
    %274 = vmatpush.msra.mxu0 0.0
    %275 = vmatpush.msra.mxu0 0.0
    %276 = vmatpush.msra.mxu0 0.0
    %277 = vmatpush.msra.mxu0 0.0
    %278 = vmatpush.msra.mxu0 0.0
    %279 = vmatpush.msra.mxu0 0.0
    %280 = vmatpush.msra.mxu0 0.0
    %281 = vmatpush.msra.mxu0 0.0
    %282 = vmatpush.msra.mxu0 0.0
    %283 = vmatpush.msra.mxu0 0.0
    %284 = vmatpush.msra.mxu0 0.0
    %285 = vmatpush.msra.mxu0 0.0
    %286 = vmatpush.msra.mxu0 0.0
    %287 = vmatpush.msra.mxu0 0.0
    %288 = vmatpush.msra.mxu0 0.0
    %v289 = vand.u32 %v186, 4294901760
    %290 = vmatpush.msra.mxu0 %v289
    %v291 = vand.u32 %v196, 4294901760
    %v292 = vsub.f32 %v196, %v291
    %v293 = vand.u32 %v292, 4294901760
    %294 = vmatmul.f32.gmra.mxu0 %v293
    %v295 = vpop.f32.mrf.mxu0
    %v296 = vadd.f32 %v272, %v295
    %297 = vdwg.mxu0
    %298 = vmatpush.msra.mxu0 0.0
    %299 = vmatpush.msra.mxu0 0.0
    %300 = vmatpush.msra.mxu0 0.0
    %301 = vmatpush.msra.mxu0 0.0
    %302 = vmatpush.msra.mxu0 0.0
    %303 = vmatpush.msra.mxu0 0.0
    %304 = vmatpush.msra.mxu0 0.0
    %305 = vmatpush.msra.mxu0 0.0
    %306 = vmatpush.msra.mxu0 0.0
    %307 = vmatpush.msra.mxu0 0.0
    %308 = vmatpush.msra.mxu0 0.0
    %309 = vmatpush.msra.mxu0 0.0
    %310 = vmatpush.msra.mxu0 0.0
    %311 = vmatpush.msra.mxu0 0.0
    %312 = vmatpush.msra.mxu0 0.0
    %v313 = vand.u32 %v186, 4294901760
    %v314 = vsub.f32 %v186, %v313
    %v315 = vand.u32 %v314, 4294901760
    %316 = vmatpush.msra.mxu0 %v315
    %v317 = vand.u32 %v196, 4294901760
    %318 = vmatmul.f32.gmra.mxu0 %v317
    %v319 = vpop.f32.mrf.mxu0
    %v320 = vadd.f32 %v296, %v319
    %321 = vdwg.mxu0
    %322 = vmatpush.msra.mxu0 0.0
    %323 = vmatpush.msra.mxu0 0.0
    %324 = vmatpush.msra.mxu0 0.0
    %325 = vmatpush.msra.mxu0 0.0
    %326 = vmatpush.msra.mxu0 0.0
    %327 = vmatpush.msra.mxu0 0.0
    %328 = vmatpush.msra.mxu0 0.0
    %329 = vmatpush.msra.mxu0 0.0
    %330 = vmatpush.msra.mxu0 0.0
    %331 = vmatpush.msra.mxu0 0.0
    %332 = vmatpush.msra.mxu0 0.0
    %333 = vmatpush.msra.mxu0 0.0
    %334 = vmatpush.msra.mxu0 0.0
    %335 = vmatpush.msra.mxu0 0.0
    %336 = vmatpush.msra.mxu0 0.0
    %v337 = vand.u32 %v186, 4294901760
    %338 = vmatpush.msra.mxu0 %v337
    %v339 = vand.u32 %v196, 4294901760
    %340 = vmatmul.f32.gmra.mxu0 %v339
    %v341 = vpop.f32.mrf.mxu0
    %v342 = vadd.f32 %v320, %v341
    %343 = vdwg.mxu0
    %344 = vst [vmem:[#allocation2] sm:$0xf] %v186
    %345 = vst [vmem:[#allocation4] sm:$0x7] %v342
    %vm346 = vcmask 1042432
    %v347 = vsel %vm346, %v342, -inf
    %v348 = vrot.slane %v347, 4
    %v349 = vmax.f32 %v347, %v348
    %v350 = vrot.slane %v349, 2
    %v351 = vmax.f32 %v349, %v350
    %v352 = vrot.slane %v351, 1
    %v353 = vmax.f32 %v351, %v352
    %v354 = vsub.f32 %v342, %v353
    %v355 = vmul.f32 %v354, 1.442695
    %v356 = vpow.pop %v355
    %v357 = vsel %vm346, %v356, 0.0
    %v358 = vrot.slane %v357, 4
    %v359 = vadd.f32 %v357, %v358
    %v360 = vrot.slane %v359, 2
    %v361 = vadd.f32 %v359, %v360
    %v362 = vrot.slane %v361, 1
    %v363 = vadd.f32 %v361, %v362
    %v364 = vlog2.pop %v363
    %v365 = vmul.f32 %v364, 0.6931472
    %v366 = vadd.f32 %v353, %v365
    %v367 = vlaneseq
    %v368 = vshrl.u32 %v367, 7
    %v369 = vld [vmem:[%s5] sm:$0x1]
    %v370 = vperm.slane %v369, 0
    %vm371 = vcmp.eq.s32.totalorder %v368, %v370
    %v372 = vsel %vm371, %v342, 0.0
    %v373 = vsel %vm346, %v372, 0.0
    %v374 = vrot.slane %v373, 4
    %v375 = vadd.f32 %v373, %v374
    %v376 = vrot.slane %v375, 2
    %v377 = vadd.f32 %v375, %v376
    %v378 = vrot.slane %v377, 1
    %v379 = vadd.f32 %v377, %v378
    %vm380 = vcmp.ne.s32.totalorder %v369, 4294967295
    %v381 = vsel %vm380, 1, 0
    %v382 = vcvt.s32.f32 %v381
    %v383 = vsub.f32 %v366, %v379
    %v384 = vmul.f32 %v383, %v382
    %vm385 = vcmask 1040384
    %v386 = vsel %vm385, %v384, 0.0
    %387 = vadd.xlane.f32.xlu0 %v386
    %v388 = vpop.xlane.xlu0 %387
    %vm389 = vcmask 0
    %390 = vst.msk [vmem:[#allocation6] sm:$0x1] %vm389, %v388
    %v391 = vsel %vm385, %v382, 0.0
    %392 = vadd.xlane.f32.xlu0 %v391
    %v393 = vpop.xlane.xlu0 %392
    %394 = vst.msk [vmem:[#allocation7] sm:$0x1] %vm389, %v393
    // Predicated region
    $region26: #{networkb_forward.1} parent=1 // pred_check
      _
    $region27: #{networkb_forward.1} parent=1 // pred_check_branch
      %396 = sbr.rel (0) target = $region29
    $region28: #{networkb_forward.1} parent=1 // pred_region
      %398 = vsyncadd [#allocation3], 0
      %s400 = sshll.u32 [#allocation2], 4
      %s401 = int_to_ptr.vmem [resolvable:$true] %s400
      %s402 = sshll.u32 %s6, 4
      %s403 = int_to_ptr.hbm [resolvable:$true] %s402
      %405 = dma.vmem_to_hbm [thread:$0]  %s401, 64, %s403, [#allocation3]
    $region29: #{networkb_forward.1} parent=1 // pred_fallthru
      _
    // Predicated region
    $region30: #{networkb_forward.1} parent=1 // pred_check
      _
    $region31: #{networkb_forward.1} parent=1 // pred_check_branch
      %407 = sbr.rel (0) target = $region33
    $region32: #{networkb_forward.1} parent=1 // pred_region
      %409 = vsyncadd [#allocation5], 0
      %s411 = sshll.u32 [#allocation4], 4
      %s412 = int_to_ptr.vmem [resolvable:$true] %s411
      %s413 = sshll.u32 %s7, 4
      %s414 = int_to_ptr.hbm [resolvable:$true] %s413
      %416 = dma.vmem_to_hbm [thread:$0]  %s412, 64, %s414, [#allocation5]
    $region33: #{networkb_forward.1} parent=1 // pred_fallthru
      _
    // Predicated region
    $region34: #{networkb_forward.1} parent=1 // pred_check
      _
    $region35: #{networkb_forward.1} parent=1 // pred_check_branch
      %418 = sbr.rel (0) target = $region37
    $region36: #{networkb_forward.1} parent=1 // pred_region
      %420 = vsyncadd [#allocation5], 0
      %s422 = sshll.u32 [#allocation6], 4
      %s423 = int_to_ptr.vmem [resolvable:$true] %s422
      %s424 = sshll.u32 %s8, 4
      %s425 = int_to_ptr.hbm [resolvable:$true] %s424
      %427 = dma.vmem_to_hbm [thread:$0]  %s423, 16, %s425, [#allocation5]
    $region37: #{networkb_forward.1} parent=1 // pred_fallthru
      _
    // Predicated region
    $region38: #{networkb_forward.1} parent=1 // pred_check
      _
    $region39: #{networkb_forward.1} parent=1 // pred_check_branch
      %429 = sbr.rel (0) target = $region41
    $region40: #{networkb_forward.1} parent=1 // pred_region
      %431 = vsyncadd [#allocation8], 0
      %s433 = sshll.u32 [#allocation7], 4
      %s434 = int_to_ptr.vmem [resolvable:$true] %s433
      %s435 = sshll.u32 %s9, 4
      %s436 = int_to_ptr.hbm [resolvable:$true] %s435
      %438 = dma.vmem_to_hbm [thread:$0]  %s434, 16, %s436, [#allocation8]
    $region41: #{networkb_forward.1} parent=1 // pred_fallthru
      _
    // Predicated region
    $region42: #{networkb_forward.1} parent=1 // pred_check
      _
    $region43: #{networkb_forward.1} parent=1 // pred_check_branch
      %440 = sbr.rel (0) target = $region45
    $region44: #{networkb_forward.1} parent=1 // pred_region
      %442 = dma.done [#allocation3], 64
    $region45: #{networkb_forward.1} parent=1 // pred_fallthru
      _
    // Predicated region
    $region46: #{networkb_forward.1} parent=1 // pred_check
      _
    $region47: #{networkb_forward.1} parent=1 // pred_check_branch
      %444 = sbr.rel (0) target = $region49
    $region48: #{networkb_forward.1} parent=1 // pred_region
      %446 = dma.done [#allocation5], 64
    $region49: #{networkb_forward.1} parent=1 // pred_fallthru
      _
    // Predicated region
    $region50: #{networkb_forward.1} parent=1 // pred_check
      _
    $region51: #{networkb_forward.1} parent=1 // pred_check_branch
      %448 = sbr.rel (0) target = $region53
    $region52: #{networkb_forward.1} parent=1 // pred_region
      %450 = dma.done [#allocation5], 16
    $region53: #{networkb_forward.1} parent=1 // pred_fallthru
      _
    // Predicated region
    $region54: #{networkb_forward.1} parent=1 // pred_check
      _
    $region55: #{networkb_forward.1} parent=1 // pred_check_branch
      %452 = sbr.rel (0) target = $region57
    $region56: #{networkb_forward.1} parent=1 // pred_region
      %454 = dma.done [#allocation8], 16
    $region57: #{networkb_forward.1} parent=1 // pred_fallthru
      _
    %455 = vsyncpa [#allocation3], 1
    %456 = vsyncpa [#allocation5], 1
    %457 = vsyncpa [#allocation8], 1

</llo_original>
